<compile_context>
chip_gen: v7x
topology: tpu7x:2x2x1
jax: 0.10.0
libtpu: 0.0.40
codegen_flags: <defaults>
</compile_context>

<pallas_src>
import functools

import jax
import jax.numpy as jnp
from jax.experimental import pallas as pl
from jax.experimental.pallas import tpu as pltpu


_VMEM_LIMIT = 32 * 1024 * 1024  # well under physical VMEM on v5e/v6e/v7x


def _round_up(x, m):
    return (x + m - 1) // m * m


def _conv_out(s, k, st):
    return (s - k) // st + 1


# ----------------------------------------------------------------------------
# Kernel 1: tiled  Y = relu?(X @ W + b)   (bf16 operands, f32 accumulate)
# ----------------------------------------------------------------------------
def _matmul_bias_kernel(x_ref, w_ref, b_ref, o_ref, *, relu):
    acc = jnp.dot(x_ref[...], w_ref[...], preferred_element_type=jnp.float32)
    acc = acc + b_ref[...]                       # f32 epilogue (v5e-safe)
    if relu:
        acc = jnp.maximum(acc, 0.0)
    o_ref[...] = acc.astype(o_ref.dtype)


def pallas_linear(x, w, b, *, relu, out_dtype=jnp.float32, tile_m=512):
    """x: (M, K), w: (K, N), b: (N,) -> (M, N) out_dtype."""
    M, K = x.shape
    K2, N = w.shape
    assert K == K2
    x = x.astype(jnp.bfloat16)
    w = w.astype(jnp.bfloat16)
    b2 = b.reshape(1, N).astype(jnp.float32)

    tm = min(tile_m, _round_up(M, 8))            # sublane-aligned row tile
    mp = _round_up(M, tm)
    if mp != M:
        x = jnp.pad(x, ((0, mp - M), (0, 0)))
    grid = (mp // tm,)

    cost = pl.CostEstimate(
        flops=2 * mp * K * N,
        transcendentals=0,
        bytes_accessed=(mp * K * 2 + K * N * 2 + N * 4
                        + mp * N * jnp.dtype(out_dtype).itemsize),
    )
    out = pl.pallas_call(
        functools.partial(_matmul_bias_kernel, relu=relu),
        out_shape=jax.ShapeDtypeStruct((mp, N), out_dtype),
        grid=grid,
        in_specs=[
            pl.BlockSpec((tm, K), lambda i: (i, 0)),   # row tile of X
            pl.BlockSpec((K, N), lambda i: (0, 0)),    # resident weight
            pl.BlockSpec((1, N), lambda i: (0, 0)),    # resident bias
        ],
        out_specs=pl.BlockSpec((tm, N), lambda i: (i, 0)),
        compiler_params=pltpu.CompilerParams(
            dimension_semantics=("parallel",),
            vmem_limit_bytes=_VMEM_LIMIT,
        ),
        cost_estimate=cost,
    )(x, w, b2)
    return out[:M] if mp != M else out


# ----------------------------------------------------------------------------
# Kernel 2: fused head  Q = (relu(X @ W1 + b1)) @ W2p + b2p
#           (fc1 intermediate stays in VMEM; W2p is 128-lane padded)
# ----------------------------------------------------------------------------
def _fc_head_kernel(x_ref, w1_ref, b1_ref, w2_ref, b2_ref, o_ref):
    h = jnp.dot(x_ref[...], w1_ref[...], preferred_element_type=jnp.float32)
    h = jnp.maximum(h + b1_ref[...], 0.0)                    # fc1 + ReLU, f32
    q = jnp.dot(h.astype(w2_ref.dtype), w2_ref[...],
                preferred_element_type=jnp.float32)
    o_ref[...] = (q + b2_ref[...]).astype(o_ref.dtype)


def pallas_fc_head(x, w1, b1, w2p, b2p, *, tile_m=256):
    """x: (M, K), w1: (K, H), w2p: (H, Np) -> (M, Np) f32, Np lane-dense."""
    M, K = x.shape
    H = w1.shape[1]
    Np = w2p.shape[1]
    x = x.astype(jnp.bfloat16)

    tm = min(tile_m, _round_up(M, 8))
    mp = _round_up(M, tm)
    if mp != M:
        x = jnp.pad(x, ((0, mp - M), (0, 0)))
    grid = (mp // tm,)

    cost = pl.CostEstimate(
        flops=2 * mp * K * H + 2 * mp * H * Np,
        transcendentals=0,
        bytes_accessed=(mp * K * 2 + K * H * 2 + H * Np * 2
                        + H * 4 + Np * 4 + mp * Np * 4),
    )
    out = pl.pallas_call(
        _fc_head_kernel,
        out_shape=jax.ShapeDtypeStruct((mp, Np), jnp.float32),
        grid=grid,
        in_specs=[
            pl.BlockSpec((tm, K), lambda i: (i, 0)),
            pl.BlockSpec((K, H), lambda i: (0, 0)),
            pl.BlockSpec((1, H), lambda i: (0, 0)),
            pl.BlockSpec((H, Np), lambda i: (0, 0)),
            pl.BlockSpec((1, Np), lambda i: (0, 0)),
        ],
        out_specs=pl.BlockSpec((tm, Np), lambda i: (i, 0)),
        compiler_params=pltpu.CompilerParams(
            dimension_semantics=("parallel",),
            vmem_limit_bytes=_VMEM_LIMIT,
        ),
        cost_estimate=cost,
    )(x, w1.astype(jnp.bfloat16), b1.reshape(1, H).astype(jnp.float32),
      w2p.astype(jnp.bfloat16), b2p.reshape(1, Np).astype(jnp.float32))
    return out[:M] if mp != M else out


# ----------------------------------------------------------------------------
# Glue: im2col patch extraction (plain JAX; pure reshuffle, no FLOPs)
# ----------------------------------------------------------------------------
def im2col_nhwc(x, kh, kw, stride):
    """x: (N, H, W, C) -> (N*Ho*Wo, kh*kw*C) with (kh, kw, C) flatten order."""
    # TODO(synk): generate the patch matrix inside the conv kernel from an
    # NHWC VMEM tile (strided ref slices) so the inflated im2col matrix is
    # never materialized in HBM.
    n, h, w, c = x.shape
    ho = (h - kh) // stride + 1
    wo = (w - kw) // stride + 1
    patches = []
    for i in range(kh):
        for j in range(kw):
            patches.append(x[:, i:i + stride * ho:stride,
                              j:j + stride * wo:stride, :])
    p = jnp.stack(patches, axis=3)                    # (N, Ho, Wo, kh*kw, C)
    return p.reshape(n * ho * wo, kh * kw * c), ho, wo


# ----------------------------------------------------------------------------
# One-time weight packing (outside the jitted forward)
# ----------------------------------------------------------------------------
def pack_params(params, state_shape, n_actions):
    in_c, in_h, in_w = state_shape
    fc_h = _conv_out(_conv_out(in_h, 8, 4), 4, 2)
    fc_w = _conv_out(_conv_out(in_w, 8, 4), 4, 2)
    bf16 = jnp.bfloat16

    # conv filters -> (kh*kw*Cin, Cout) matmul layout, matching im2col order.
    w1 = jnp.transpose(params["conv1_w"], (2, 3, 1, 0)).reshape(8 * 8 * in_c, 16)
    w2 = jnp.transpose(params["conv2_w"], (2, 3, 1, 0)).reshape(4 * 4 * 16, 32)

    # Fold PyTorch's NCHW flatten into fc1's weight: reorder its input axis
    # from (C, H, W) to (H, W, C) so the NHWC conv2 output flattens directly.
    fc1 = params["fc1_w"].reshape(256, 32, fc_h, fc_w)
    fc1 = jnp.transpose(fc1, (2, 3, 1, 0)).reshape(fc_h * fc_w * 32, 256)

    # Pad the head to 128 output columns -> lane-dense final store.
    n_pad = _round_up(n_actions, 128)
    wf = jnp.zeros((256, n_pad), jnp.float32).at[:, :n_actions].set(
        params["final_w"].T)
    bf = jnp.zeros((n_pad,), jnp.float32).at[:n_actions].set(params["final_b"])

    return {
        "w1": w1.astype(bf16), "b1": params["conv1_b"].astype(jnp.float32),
        "w2": w2.astype(bf16), "b2": params["conv2_b"].astype(jnp.float32),
        "fc1_w": fc1.astype(bf16), "fc1_b": params["fc1_b"].astype(jnp.float32),
        "final_w": wf.astype(bf16), "final_b": bf,
    }


# ----------------------------------------------------------------------------
# BreakoutQNet forward
# ----------------------------------------------------------------------------
def breakout_qnet_forward(state_nchw, packed, *, n_actions):
    n = state_nchw.shape[0]
    x = jnp.transpose(state_nchw, (0, 2, 3, 1)).astype(jnp.bfloat16)  # NHWC

    # conv1: Conv2d(C -> 16, k=8, s=4) + ReLU
    p1, h1, w1o = im2col_nhwc(x, 8, 8, 4)
    a1 = pallas_linear(p1, packed["w1"], packed["b1"], relu=True,
                       out_dtype=jnp.bfloat16)
    a1 = a1.reshape(n, h1, w1o, 16)

    # conv2: Conv2d(16 -> 32, k=4, s=2) + ReLU
    p2, h2, w2o = im2col_nhwc(a1, 4, 4, 2)
    a2 = pallas_linear(p2, packed["w2"], packed["b2"], relu=True,
                       out_dtype=jnp.bfloat16)

    # Flatten in (H, W, C) order; fc1's weight was pre-permuted to match the
    # PyTorch NCHW flatten, so no activation transpose is needed here.
    h_flat = a2.reshape(n, h2 * w2o * 32)

    # fc1 + ReLU + final_fc fused; slice off the 128-lane padding.
    q_pad = pallas_fc_head(h_flat, packed["fc1_w"], packed["fc1_b"],
                           packed["final_w"], packed["final_b"])
    return q_pad[:, :n_actions]


# ----------------------------------------------------------------------------
# Deterministic parameter init (synthetic; matches module's __init__ shapes)
# ----------------------------------------------------------------------------
def init_params(key, state_shape, n_actions):
    in_c, in_h, in_w = state_shape
    fc_h = _conv_out(_conv_out(in_h, 8, 4), 4, 2)
    fc_w = _conv_out(_conv_out(in_w, 8, 4), 4, 2)
    fc_in = fc_h * fc_w * 32

    ks = jax.random.split(key, 8)
    u = lambda k, shape, fan_in: jax.random.uniform(
        k, shape, jnp.float32, -1.0, 1.0) / jnp.sqrt(jnp.float32(fan_in))
    return {
        "conv1_w": u(ks[0], (16, in_c, 8, 8), in_c * 8 * 8),
        "conv1_b": u(ks[1], (16,), in_c * 8 * 8),
        "conv2_w": u(ks[2], (32, 16, 4, 4), 16 * 4 * 4),
        "conv2_b": u(ks[3], (32,), 16 * 4 * 4),
        "fc1_w":   u(ks[4], (256, fc_in), fc_in),
        "fc1_b":   u(ks[5], (256,), fc_in),
        "final_w": u(ks[6], (n_actions, 256), 256),
        "final_b": u(ks[7], (n_actions,), 256),
    }


if __name__ == "__main__":
    # Small but architecture-consistent shapes:
    #   (28-8)//4+1 = 6 ; (6-4)//2+1 = 2  ->  fc_in = 2*2*32 = 128
    state_shape = (4, 28, 28)     # (C, H, W)
    n_actions = 4
    batch = 2

    key = jax.random.PRNGKey(0)
    k_x, k_p = jax.random.split(key)
    x = jax.random.normal(k_x, (batch,) + state_shape, dtype=jnp.float32)
    params = init_params(k_p, state_shape, n_actions)
    packed = pack_params(params, state_shape, n_actions)   # one-time pre-pack

    fwd = jax.jit(functools.partial(breakout_qnet_forward, n_actions=n_actions))
    q_values = fwd(x, packed)
    jax.block_until_ready(q_values)
    assert q_values.shape == (batch, n_actions)
    print("KERNEL_OK")
</pallas_src>

<mosaic_0001>
module attributes {stable_mosaic.version = 11 : i64} {
  func.func @_matmul_bias_kernel(%arg0: i32, %arg1: memref<72x256xbf16, #tpu.memory_space<vmem>>, %arg2: memref<256x16xbf16, #tpu.memory_space<vmem>>, %arg3: memref<1x16xf32, #tpu.memory_space<vmem>>, %arg4: memref<72x16xbf16, #tpu.memory_space<vmem>>) attributes {dimension_semantics = [#tpu.dimension_semantics<parallel>], iteration_bounds = array<i64: 1>, scalar_prefetch = 0 : i64, scratch_operands = 0 : i64, tpu.core_type = #tpu.core_type<tc>, window_params = [{transform_indices = @transform_0, window_bounds = array<i64: 72, 256>}, {pipeline_mode = #tpu.pipeline_mode<synchronous>, transform_indices = @transform_1, window_bounds = array<i64: 256, 16>}, {pipeline_mode = #tpu.pipeline_mode<synchronous>, transform_indices = @transform_2, window_bounds = array<i64: 1, 16>}, {transform_indices = @transform_3, window_bounds = array<i64: 72, 16>}]} {
    %c0 = arith.constant 0 : index
    %c0_0 = arith.constant 0 : index
    %0 = vector.load %arg1[%c0, %c0_0] : memref<72x256xbf16, #tpu.memory_space<vmem>>, vector<72x256xbf16>
    %c0_1 = arith.constant 0 : index
    %c0_2 = arith.constant 0 : index
    %1 = vector.load %arg2[%c0_1, %c0_2] : memref<256x16xbf16, #tpu.memory_space<vmem>>, vector<256x16xbf16>
    %cst = arith.constant dense<0.000000e+00> : vector<72x16xf32>
    %2 = tpu.matmul %0, %1, %cst {dimension_numbers = #tpu.dot_dimension_numbers<[1], [0], [0], [1], [0, 0, 1, 1], [], []>} : vector<72x256xbf16>, vector<256x16xbf16>, vector<72x16xf32> -> vector<72x16xf32>
    %c0_3 = arith.constant 0 : index
    %c0_4 = arith.constant 0 : index
    %3 = vector.load %arg3[%c0_3, %c0_4] : memref<1x16xf32, #tpu.memory_space<vmem>>, vector<1x16xf32>
    %4 = vector.broadcast %3 : vector<1x16xf32> to vector<72x16xf32>
    %5 = arith.addf %2, %4 : vector<72x16xf32>
    %cst_5 = arith.constant 0.000000e+00 : f32
    %6 = vector.broadcast %cst_5 : f32 to vector<72x16xf32>
    %7 = arith.maximumf %5, %6 : vector<72x16xf32>
    %8 = arith.truncf %7 : vector<72x16xf32> to vector<72x16xbf16>
    %c0_6 = arith.constant 0 : index
    %c0_7 = arith.constant 0 : index
    %9 = vector.load %arg4[%c0_6, %c0_7] : memref<72x16xbf16, #tpu.memory_space<vmem>>, vector<72x16xbf16>
    tpu.vector_store %arg4[%c0_6, %c0_7], %8 {strides = array<i32>} : memref<72x16xbf16, #tpu.memory_space<vmem>>, vector<72x16xbf16>,
    return
  }
  func.func @transform_0(%arg0: i32) -> (i32, i32) {
    %c0_i32 = arith.constant 0 : i32
    %c0_i32_0 = arith.constant 0 : i32
    return %arg0, %c0_i32 : i32, i32
  }
  func.func @transform_1(%arg0: i32) -> (i32, i32) {
    %c0_i32 = arith.constant 0 : i32
    %c0_i32_0 = arith.constant 0 : i32
    %c0_i32_1 = arith.constant 0 : i32
    return %c0_i32, %c0_i32_0 : i32, i32
  }
  func.func @transform_2(%arg0: i32) -> (i32, i32) {
    %c0_i32 = arith.constant 0 : i32
    %c0_i32_0 = arith.constant 0 : i32
    %c0_i32_1 = arith.constant 0 : i32
    return %c0_i32, %c0_i32_0 : i32, i32
  }
  func.func @transform_3(%arg0: i32) -> (i32, i32) {
    %c0_i32 = arith.constant 0 : i32
    %c0_i32_0 = arith.constant 0 : i32
    return %arg0, %c0_i32 : i32, i32
  }
}

module attributes {stable_mosaic.version = 11 : i64} {
  func.func @_matmul_bias_kernel(%arg0: i32, %arg1: memref<8x256xbf16, #tpu.memory_space<vmem>>, %arg2: memref<256x32xbf16, #tpu.memory_space<vmem>>, %arg3: memref<1x32xf32, #tpu.memory_space<vmem>>, %arg4: memref<8x32xbf16, #tpu.memory_space<vmem>>) attributes {dimension_semantics = [#tpu.dimension_semantics<parallel>], iteration_bounds = array<i64: 1>, scalar_prefetch = 0 : i64, scratch_operands = 0 : i64, tpu.core_type = #tpu.core_type<tc>, window_params = [{transform_indices = @transform_0, window_bounds = array<i64: 8, 256>}, {pipeline_mode = #tpu.pipeline_mode<synchronous>, transform_indices = @transform_1, window_bounds = array<i64: 256, 32>}, {pipeline_mode = #tpu.pipeline_mode<synchronous>, transform_indices = @transform_2, window_bounds = array<i64: 1, 32>}, {transform_indices = @transform_3, window_bounds = array<i64: 8, 32>}]} {
    %c0 = arith.constant 0 : index
    %c0_0 = arith.constant 0 : index
    %0 = vector.load %arg1[%c0, %c0_0] : memref<8x256xbf16, #tpu.memory_space<vmem>>, vector<8x256xbf16>
    %c0_1 = arith.constant 0 : index
    %c0_2 = arith.constant 0 : index
    %1 = vector.load %arg2[%c0_1, %c0_2] : memref<256x32xbf16, #tpu.memory_space<vmem>>, vector<256x32xbf16>
    %cst = arith.constant dense<0.000000e+00> : vector<8x32xf32>
    %2 = tpu.matmul %0, %1, %cst {dimension_numbers = #tpu.dot_dimension_numbers<[1], [0], [0], [1], [0, 0, 1, 1], [], []>} : vector<8x256xbf16>, vector<256x32xbf16>, vector<8x32xf32> -> vector<8x32xf32>
    %c0_3 = arith.constant 0 : index
    %c0_4 = arith.constant 0 : index
    %3 = vector.load %arg3[%c0_3, %c0_4] : memref<1x32xf32, #tpu.memory_space<vmem>>, vector<1x32xf32>
    %4 = vector.broadcast %3 : vector<1x32xf32> to vector<8x32xf32>
    %5 = arith.addf %2, %4 : vector<8x32xf32>
    %cst_5 = arith.constant 0.000000e+00 : f32
    %6 = vector.broadcast %cst_5 : f32 to vector<8x32xf32>
    %7 = arith.maximumf %5, %6 : vector<8x32xf32>
    %8 = arith.truncf %7 : vector<8x32xf32> to vector<8x32xbf16>
    %c0_6 = arith.constant 0 : index
    %c0_7 = arith.constant 0 : index
    %9 = vector.load %arg4[%c0_6, %c0_7] : memref<8x32xbf16, #tpu.memory_space<vmem>>, vector<8x32xbf16>
    tpu.vector_store %arg4[%c0_6, %c0_7], %8 {strides = array<i32>} : memref<8x32xbf16, #tpu.memory_space<vmem>>, vector<8x32xbf16>,
    return
  }
  func.func @transform_0(%arg0: i32) -> (i32, i32) {
    %c0_i32 = arith.constant 0 : i32
    %c0_i32_0 = arith.constant 0 : i32
    return %arg0, %c0_i32 : i32, i32
  }
  func.func @transform_1(%arg0: i32) -> (i32, i32) {
    %c0_i32 = arith.constant 0 : i32
    %c0_i32_0 = arith.constant 0 : i32
    %c0_i32_1 = arith.constant 0 : i32
    return %c0_i32, %c0_i32_0 : i32, i32
  }
  func.func @transform_2(%arg0: i32) -> (i32, i32) {
    %c0_i32 = arith.constant 0 : i32
    %c0_i32_0 = arith.constant 0 : i32
    %c0_i32_1 = arith.constant 0 : i32
    return %c0_i32, %c0_i32_0 : i32, i32
  }
  func.func @transform_3(%arg0: i32) -> (i32, i32) {
    %c0_i32 = arith.constant 0 : i32
    %c0_i32_0 = arith.constant 0 : i32
    return %arg0, %c0_i32 : i32, i32
  }
}

module attributes {stable_mosaic.version = 11 : i64} {
  func.func @_fc_head_kernel(%arg0: i32, %arg1: memref<8x128xbf16, #tpu.memory_space<vmem>>, %arg2: memref<128x256xbf16, #tpu.memory_space<vmem>>, %arg3: memref<1x256xf32, #tpu.memory_space<vmem>>, %arg4: memref<256x128xbf16, #tpu.memory_space<vmem>>, %arg5: memref<1x128xf32, #tpu.memory_space<vmem>>, %arg6: memref<8x128xf32, #tpu.memory_space<vmem>>) attributes {dimension_semantics = [#tpu.dimension_semantics<parallel>], iteration_bounds = array<i64: 1>, scalar_prefetch = 0 : i64, scratch_operands = 0 : i64, tpu.core_type = #tpu.core_type<tc>, window_params = [{transform_indices = @transform_0, window_bounds = array<i64: 8, 128>}, {pipeline_mode = #tpu.pipeline_mode<synchronous>, transform_indices = @transform_1, window_bounds = array<i64: 128, 256>}, {pipeline_mode = #tpu.pipeline_mode<synchronous>, transform_indices = @transform_2, window_bounds = array<i64: 1, 256>}, {pipeline_mode = #tpu.pipeline_mode<synchronous>, transform_indices = @transform_3, window_bounds = array<i64: 256, 128>}, {pipeline_mode = #tpu.pipeline_mode<synchronous>, transform_indices = @transform_4, window_bounds = array<i64: 1, 128>}, {transform_indices = @transform_5, window_bounds = array<i64: 8, 128>}]} {
    %c0 = arith.constant 0 : index
    %c0_0 = arith.constant 0 : index
    %0 = vector.load %arg1[%c0, %c0_0] : memref<8x128xbf16, #tpu.memory_space<vmem>>, vector<8x128xbf16>
    %c0_1 = arith.constant 0 : index
    %c0_2 = arith.constant 0 : index
    %1 = vector.load %arg2[%c0_1, %c0_2] : memref<128x256xbf16, #tpu.memory_space<vmem>>, vector<128x256xbf16>
    %cst = arith.constant dense<0.000000e+00> : vector<8x256xf32>
    %2 = tpu.matmul %0, %1, %cst {dimension_numbers = #tpu.dot_dimension_numbers<[1], [0], [0], [1], [0, 0, 1, 1], [], []>} : vector<8x128xbf16>, vector<128x256xbf16>, vector<8x256xf32> -> vector<8x256xf32>
    %c0_3 = arith.constant 0 : index
    %c0_4 = arith.constant 0 : index
    %3 = vector.load %arg3[%c0_3, %c0_4] : memref<1x256xf32, #tpu.memory_space<vmem>>, vector<1x256xf32>
    %4 = vector.broadcast %3 : vector<1x256xf32> to vector<8x256xf32>
    %5 = arith.addf %2, %4 : vector<8x256xf32>
    %cst_5 = arith.constant 0.000000e+00 : f32
    %6 = vector.broadcast %cst_5 : f32 to vector<8x256xf32>
    %7 = arith.maximumf %5, %6 : vector<8x256xf32>
    %8 = arith.truncf %7 : vector<8x256xf32> to vector<8x256xbf16>
    %c0_6 = arith.constant 0 : index
    %c0_7 = arith.constant 0 : index
    %9 = vector.load %arg4[%c0_6, %c0_7] : memref<256x128xbf16, #tpu.memory_space<vmem>>, vector<256x128xbf16>
    %cst_8 = arith.constant dense<0.000000e+00> : vector<8x128xf32>
    %10 = tpu.matmul %8, %9, %cst_8 {dimension_numbers = #tpu.dot_dimension_numbers<[1], [0], [0], [1], [0, 0, 1, 1], [], []>} : vector<8x256xbf16>, vector<256x128xbf16>, vector<8x128xf32> -> vector<8x128xf32>
    %c0_9 = arith.constant 0 : index
    %c0_10 = arith.constant 0 : index
    %11 = vector.load %arg5[%c0_9, %c0_10] : memref<1x128xf32, #tpu.memory_space<vmem>>, vector<1x128xf32>
    %12 = vector.broadcast %11 : vector<1x128xf32> to vector<8x128xf32>
    %13 = arith.addf %10, %12 : vector<8x128xf32>
    %c0_11 = arith.constant 0 : index
    %c0_12 = arith.constant 0 : index
    %14 = vector.load %arg6[%c0_11, %c0_12] : memref<8x128xf32, #tpu.memory_space<vmem>>, vector<8x128xf32>
    tpu.vector_store %arg6[%c0_11, %c0_12], %13 {strides = array<i32>} : memref<8x128xf32, #tpu.memory_space<vmem>>, vector<8x128xf32>,
    return
  }
  func.func @transform_0(%arg0: i32) -> (i32, i32) {
    %c0_i32 = arith.constant 0 : i32
    %c0_i32_0 = arith.constant 0 : i32
    return %arg0, %c0_i32 : i32, i32
  }
  func.func @transform_1(%arg0: i32) -> (i32, i32) {
    %c0_i32 = arith.constant 0 : i32
    %c0_i32_0 = arith.constant 0 : i32
    %c0_i32_1 = arith.constant 0 : i32
    return %c0_i32, %c0_i32_0 : i32, i32
  }
  func.func @transform_2(%arg0: i32) -> (i32, i32) {
    %c0_i32 = arith.constant 0 : i32
    %c0_i32_0 = arith.constant 0 : i32
    %c0_i32_1 = arith.constant 0 : i32
    return %c0_i32, %c0_i32_0 : i32, i32
  }
  func.func @transform_3(%arg0: i32) -> (i32, i32) {
    %c0_i32 = arith.constant 0 : i32
    %c0_i32_0 = arith.constant 0 : i32
    %c0_i32_1 = arith.constant 0 : i32
    return %c0_i32, %c0_i32_0 : i32, i32
  }
  func.func @transform_4(%arg0: i32) -> (i32, i32) {
    %c0_i32 = arith.constant 0 : i32
    %c0_i32_0 = arith.constant 0 : i32
    %c0_i32_1 = arith.constant 0 : i32
    return %c0_i32, %c0_i32_0 : i32, i32
  }
  func.func @transform_5(%arg0: i32) -> (i32, i32) {
    %c0_i32 = arith.constant 0 : i32
    %c0_i32_0 = arith.constant 0 : i32
    return %arg0, %c0_i32 : i32, i32
  }
}

</mosaic_0001>

<llo_original>
// kernel: breakout_qnet_forward.3
$region0: #{breakout_qnet_forward.3}
  #allocation0 [shape = 'u32[]', space=smem, size = 0x4, offset = 0x4, fixed_abs, tag = 'smem constant byte address 0x4 - core index']
  #allocation1 [shape = 'u32[144,128]{1,0:T(1,128)}', space=vmem, size = 0x12000, scoped, tag = 'internal scratch']
  %s0 = inlined_call_operand.vmem [shape: bf16[72,256], index: 0, kind: input, shape index: {}]
  %s1 = inlined_call_operand.vmem [shape: bf16[256,16], index: 1, kind: input, shape index: {}]
  %s2 = inlined_call_operand.vmem [shape: f32[1,16], index: 2, kind: input, shape index: {}]
  %s3 = inlined_call_operand.vmem [shape: bf16[72,16], index: 3, kind: output, shape index: {}]
  %s4 = sld [smem:[#allocation0]]
  $region22: #{breakout_qnet_forward.3} parent=0
    _
  %s6 = ssub.s32 1, %s4
  %s7 = scalar_select 0, %s6, %s4
  // Predicated region
  $region2: #{breakout_qnet_forward.3} parent=0 // pred_check
    _
  $region3: #{breakout_qnet_forward.3} parent=0 // pred_check_branch
    %9 = sbr.rel (0) target = $region5
  $region4: #{breakout_qnet_forward.3} parent=0 // pred_region
    _
  $region5: #{breakout_qnet_forward.3} parent=0 // pred_fallthru
    _
  // Predicated region
  $region6: #{breakout_qnet_forward.3} parent=0 // pred_check
    _
  $region7: #{breakout_qnet_forward.3} parent=0 // pred_check_branch
    %11 = sbr.rel (0) target = $region9
  $region8: #{breakout_qnet_forward.3} parent=0 // pred_region
    _
  $region9: #{breakout_qnet_forward.3} parent=0 // pred_fallthru
    _
  // Predicated region
  $region10: #{breakout_qnet_forward.3} parent=0 // pred_check
    _
  $region11: #{breakout_qnet_forward.3} parent=0 // pred_check_branch
    %13 = sbr.rel (0) target = $region13
  $region12: #{breakout_qnet_forward.3} parent=0 // pred_region
    _
  $region13: #{breakout_qnet_forward.3} parent=0 // pred_fallthru
    _
  %v15 = vld [vmem:[%s0] sm:$0xff]
  %v16 = vld [vmem:[%s0 + $0x8] sm:$0xff]
  %v17 = vld [vmem:[%s0 + $0x10] sm:$0xff]
  %v18 = vld [vmem:[%s0 + $0x18] sm:$0xff]
  %v19 = vld [vmem:[%s0 + $0x20] sm:$0xff]
  %v20 = vld [vmem:[%s0 + $0x28] sm:$0xff]
  %v21 = vld [vmem:[%s0 + $0x30] sm:$0xff]
  %v22 = vld [vmem:[%s0 + $0x38] sm:$0xff]
  %v23 = vld [vmem:[%s0 + $0x40] sm:$0xff]
  %v24 = vld [vmem:[%s1] sm:$0xf]
  %v25 = vld [vmem:[%s1 + $0x4] sm:$0xf]
  %v26 = vld [vmem:[%s1 + $0x8] sm:$0xf]
  %v27 = vld [vmem:[%s1 + $0xc] sm:$0xf]
  %v28 = vld [vmem:[%s1 + $0x10] sm:$0xf]
  %v29 = vld [vmem:[%s1 + $0x14] sm:$0xf]
  %v30 = vld [vmem:[%s1 + $0x18] sm:$0xf]
  %v31 = vld [vmem:[%s1 + $0x1c] sm:$0xf]
  %v32 = vld [vmem:[%s1 + $0x20] sm:$0xf]
  %v33 = vld [vmem:[%s1 + $0x24] sm:$0xf]
  %v34 = vld [vmem:[%s1 + $0x28] sm:$0xf]
  %v35 = vld [vmem:[%s1 + $0x2c] sm:$0xf]
  %v36 = vld [vmem:[%s1 + $0x30] sm:$0xf]
  %v37 = vld [vmem:[%s1 + $0x34] sm:$0xf]
  %v38 = vld [vmem:[%s1 + $0x38] sm:$0xf]
  %v39 = vld [vmem:[%s1 + $0x3c] sm:$0xf]
  %v40 = vld [vmem:[%s1 + $0x40] sm:$0xf]
  %v41 = vld [vmem:[%s1 + $0x44] sm:$0xf]
  %v42 = vld [vmem:[%s1 + $0x48] sm:$0xf]
  %v43 = vld [vmem:[%s1 + $0x4c] sm:$0xf]
  %v44 = vld [vmem:[%s1 + $0x50] sm:$0xf]
  %v45 = vld [vmem:[%s1 + $0x54] sm:$0xf]
  %v46 = vld [vmem:[%s1 + $0x58] sm:$0xf]
  %v47 = vld [vmem:[%s1 + $0x5c] sm:$0xf]
  %v48 = vld [vmem:[%s1 + $0x60] sm:$0xf]
  %v49 = vld [vmem:[%s1 + $0x64] sm:$0xf]
  %v50 = vld [vmem:[%s1 + $0x68] sm:$0xf]
  %v51 = vld [vmem:[%s1 + $0x6c] sm:$0xf]
  %v52 = vld [vmem:[%s1 + $0x70] sm:$0xf]
  %v53 = vld [vmem:[%s1 + $0x74] sm:$0xf]
  %v54 = vld [vmem:[%s1 + $0x78] sm:$0xf]
  %v55 = vld [vmem:[%s1 + $0x7c] sm:$0xf]
  %v56 = vld [vmem:[%s2] sm:$0x1]
  %v58 = vlaneseq
  %v59 = vshrl.u32 %v58, 7
  %v60 = vsub.s32 0, %v59
  %v61 = vrot.slane %v56, %v60
  %v72 = vunpack.c.l.b16 %v15
  %v73 = vunpack.c.h.b16 %v15
  %v74 = vunpack.c.l.b16 %v16
  %v75 = vunpack.c.h.b16 %v16
  %v76 = vunpack.c.l.b16 %v17
  %v77 = vunpack.c.h.b16 %v17
  %v78 = vunpack.c.l.b16 %v18
  %v79 = vunpack.c.h.b16 %v18
  %v80 = vunpack.c.l.b16 %v19
  %v81 = vunpack.c.h.b16 %v19
  %v82 = vunpack.c.l.b16 %v20
  %v83 = vunpack.c.h.b16 %v20
  %v84 = vunpack.c.l.b16 %v21
  %v85 = vunpack.c.h.b16 %v21
  %v86 = vunpack.c.l.b16 %v22
  %v87 = vunpack.c.h.b16 %v22
  %v88 = vunpack.c.l.b16 %v23
  %v89 = vunpack.c.h.b16 %v23
  %v90 = vpack.c.b16 %v74, %v72
  %v91 = vpack.c.b16 %v75, %v73
  %v92 = vpack.c.b16 %v78, %v76
  %v93 = vpack.c.b16 %v79, %v77
  %v94 = vpack.c.b16 %v82, %v80
  %v95 = vpack.c.b16 %v83, %v81
  %v96 = vpack.c.b16 %v86, %v84
  %v97 = vpack.c.b16 %v87, %v85
  %v98 = vpack.c.b16 %v88, %v88
  %v99 = vpack.c.b16 %v89, %v89
  %v142 = vunpack.c.l.b16 %v24
  %v143 = vunpack.c.l.b16 %v25
  %v144 = vunpack.c.l.b16 %v26
  %v145 = vunpack.c.l.b16 %v27
  %v146 = vunpack.c.l.b16 %v28
  %v147 = vunpack.c.l.b16 %v29
  %v148 = vunpack.c.l.b16 %v30
  %v149 = vunpack.c.l.b16 %v31
  %v150 = vunpack.c.l.b16 %v32
  %v151 = vunpack.c.l.b16 %v33
  %v152 = vunpack.c.l.b16 %v34
  %v153 = vunpack.c.l.b16 %v35
  %v154 = vunpack.c.l.b16 %v36
  %v155 = vunpack.c.l.b16 %v37
  %v156 = vunpack.c.l.b16 %v38
  %v157 = vunpack.c.l.b16 %v39
  %v158 = vunpack.c.l.b16 %v40
  %v159 = vunpack.c.l.b16 %v41
  %v160 = vunpack.c.l.b16 %v42
  %v161 = vunpack.c.l.b16 %v43
  %v162 = vunpack.c.l.b16 %v44
  %v163 = vunpack.c.l.b16 %v45
  %v164 = vunpack.c.l.b16 %v46
  %v165 = vunpack.c.l.b16 %v47
  %v166 = vunpack.c.l.b16 %v48
  %v167 = vunpack.c.l.b16 %v49
  %v168 = vunpack.c.l.b16 %v50
  %v169 = vunpack.c.l.b16 %v51
  %v170 = vunpack.c.l.b16 %v52
  %v171 = vunpack.c.l.b16 %v53
  %v172 = vunpack.c.l.b16 %v54
  %v173 = vunpack.c.l.b16 %v55
  %v174 = vpack.c.b16 %v143, %v142
  %v175 = vpack.c.b16 %v145, %v144
  %v176 = vpack.c.b16 %v147, %v146
  %v177 = vpack.c.b16 %v149, %v148
  %v178 = vpack.c.b16 %v151, %v150
  %v179 = vpack.c.b16 %v153, %v152
  %v180 = vpack.c.b16 %v155, %v154
  %v181 = vpack.c.b16 %v157, %v156
  %v182 = vpack.c.b16 %v159, %v158
  %v183 = vpack.c.b16 %v161, %v160
  %v184 = vpack.c.b16 %v163, %v162
  %v185 = vpack.c.b16 %v165, %v164
  %v186 = vpack.c.b16 %v167, %v166
  %v187 = vpack.c.b16 %v169, %v168
  %v188 = vpack.c.b16 %v171, %v170
  %v189 = vpack.c.b16 %v173, %v172
  %206 = vmatprep.subr.bf16.mxu0 0
  %207 = vmatpush1.bf16.msra.mxu0 %v174
  %208 = vmatprep.subr.bf16.mxu0 0
  %209 = vmatpush1.bf16.msra.mxu0 %v175
  %210 = vmatprep.subr.bf16.mxu0 0
  %211 = vmatpush1.bf16.msra.mxu0 %v176
  %212 = vmatprep.subr.bf16.mxu0 0
  %213 = vmatpush1.bf16.msra.mxu0 %v177
  %214 = vmatprep.subr.bf16.mxu0 0
  %215 = vmatpush1.bf16.msra.mxu0 %v178
  %216 = vmatprep.subr.bf16.mxu0 0
  %217 = vmatpush1.bf16.msra.mxu0 %v179
  %218 = vmatprep.subr.bf16.mxu0 0
  %219 = vmatpush1.bf16.msra.mxu0 %v180
  %220 = vmatprep.subr.bf16.mxu0 0
  %221 = vmatpush1.bf16.msra.mxu0 %v181
  %222 = vmatprep.subr.bf16.mxu0 0
  %223 = vmatpush1.bf16.msra.mxu0 %v182
  %224 = vmatprep.subr.bf16.mxu0 0
  %225 = vmatpush1.bf16.msra.mxu0 %v183
  %226 = vmatprep.subr.bf16.mxu0 0
  %227 = vmatpush1.bf16.msra.mxu0 %v184
  %228 = vmatprep.subr.bf16.mxu0 0
  %229 = vmatpush1.bf16.msra.mxu0 %v185
  %230 = vmatprep.subr.bf16.mxu0 0
  %231 = vmatpush1.bf16.msra.mxu0 %v186
  %232 = vmatprep.subr.bf16.mxu0 0
  %233 = vmatpush1.bf16.msra.mxu0 %v187
  %234 = vmatprep.subr.bf16.mxu0 0
  %235 = vmatpush1.bf16.msra.mxu0 %v188
  %236 = vmatprep.subr.bf16.mxu0 0
  %237 = vmatpush1.bf16.msra.mxu0 %v189
  %238 = vmatprep.mubr.bf16.mxu0 %v91
  %239 = vmatmul.mubr.bf16.gmra.mrb[0].mxu0 %v90
  %v240 = vpop.f32.mrb[0].mxu0
  %v241 = vadd.f32 %v61, %v240
  %v242 = vpop.f32.mrb[0].mxu0
  %v243 = vpop.f32.mrb[0].mxu0
  %v244 = vadd.f32 %v61, %v243
  %v245 = vpop.f32.mrb[0].mxu0
  %246 = vmatprep.mubr.bf16.mxu0 %v93
  %247 = vmatmul.mubr.bf16.gmra.mrb[0].mxu0 %v92
  %v248 = vpop.f32.mrb[0].mxu0
  %v249 = vadd.f32 %v61, %v248
  %v250 = vpop.f32.mrb[0].mxu0
  %v251 = vpop.f32.mrb[0].mxu0
  %v252 = vadd.f32 %v61, %v251
  %v253 = vpop.f32.mrb[0].mxu0
  %254 = vmatprep.mubr.bf16.mxu0 %v95
  %255 = vmatmul.mubr.bf16.gmra.mrb[0].mxu0 %v94
  %v256 = vpop.f32.mrb[0].mxu0
  %v257 = vadd.f32 %v61, %v256
  %v258 = vpop.f32.mrb[0].mxu0
  %v259 = vpop.f32.mrb[0].mxu0
  %v260 = vadd.f32 %v61, %v259
  %v261 = vpop.f32.mrb[0].mxu0
  %262 = vmatprep.mubr.bf16.mxu0 %v97
  %263 = vmatmul.mubr.bf16.gmra.mrb[0].mxu0 %v96
  %v264 = vpop.f32.mrb[0].mxu0
  %v265 = vadd.f32 %v61, %v264
  %v266 = vpop.f32.mrb[0].mxu0
  %v267 = vpop.f32.mrb[0].mxu0
  %v268 = vadd.f32 %v61, %v267
  %v269 = vpop.f32.mrb[0].mxu0
  %270 = vmatprep.mubr.bf16.mxu0 %v99
  %271 = vmatmul.mubr.bf16.gmra.mrb[0].mxu0 %v98
  %v272 = vpop.f32.mrb[0].mxu0
  %v273 = vadd.f32 %v61, %v272
  %v274 = vpop.f32.mrb[0].mxu0
  %v275 = vpop.f32.mrb[0].mxu0
  %v276 = vpop.f32.mrb[0].mxu0
  %277 = vdwg.mxu0
  %v278 = vmax.f32 %v241, 0.0
  %v279 = vmax.f32 %v244, 0.0
  %v280 = vmax.f32 %v249, 0.0
  %v281 = vmax.f32 %v252, 0.0
  %v282 = vmax.f32 %v257, 0.0
  %v283 = vmax.f32 %v260, 0.0
  %v284 = vmax.f32 %v265, 0.0
  %v285 = vmax.f32 %v268, 0.0
  %v286 = vmax.f32 %v273, 0.0
  %v287 = vpack.c.bf16 %v279, %v278
  %v288 = vpack.c.bf16 %v281, %v280
  %v289 = vpack.c.bf16 %v283, %v282
  %v290 = vpack.c.bf16 %v285, %v284
  %v291 = vpack.c.bf16 %v286, %v286
  %v297 = vunpack.c.l.b16 %v287
  %v298 = vunpack.c.h.b16 %v287
  %v299 = vunpack.c.l.b16 %v288
  %v300 = vunpack.c.h.b16 %v288
  %v301 = vunpack.c.l.b16 %v289
  %v302 = vunpack.c.h.b16 %v289
  %v303 = vunpack.c.l.b16 %v290
  %v304 = vunpack.c.h.b16 %v290
  %v305 = vunpack.c.l.b16 %v291
  %v306 = vpack.c.b16 %v297, %v297
  %v307 = vpack.c.b16 %v298, %v298
  %v308 = vpack.c.b16 %v299, %v299
  %v309 = vpack.c.b16 %v300, %v300
  %v310 = vpack.c.b16 %v301, %v301
  %v311 = vpack.c.b16 %v302, %v302
  %v312 = vpack.c.b16 %v303, %v303
  %v313 = vpack.c.b16 %v304, %v304
  %v314 = vpack.c.b16 %v305, %v305
  %vm324 = vcmask 125952
  %325 = vst.msk [vmem:[%s3] sm:$0xf] %vm324, %v306
  %326 = vst.msk [vmem:[%s3 + $0x4] sm:$0xf] %vm324, %v307
  %327 = vst.msk [vmem:[%s3 + $0x8] sm:$0xf] %vm324, %v308
  %328 = vst.msk [vmem:[%s3 + $0xc] sm:$0xf] %vm324, %v309
  %329 = vst.msk [vmem:[%s3 + $0x10] sm:$0xf] %vm324, %v310
  %330 = vst.msk [vmem:[%s3 + $0x14] sm:$0xf] %vm324, %v311
  %331 = vst.msk [vmem:[%s3 + $0x18] sm:$0xf] %vm324, %v312
  %332 = vst.msk [vmem:[%s3 + $0x1c] sm:$0xf] %vm324, %v313
  %333 = vst.msk [vmem:[%s3 + $0x20] sm:$0xf] %vm324, %v314
  // Predicated region
  $region14: #{breakout_qnet_forward.3} parent=0 // pred_check
    _
  $region15: #{breakout_qnet_forward.3} parent=0 // pred_check_branch
    %335 = sbr.rel (0) target = $region17
  $region16: #{breakout_qnet_forward.3} parent=0 // pred_region
    _
  $region17: #{breakout_qnet_forward.3} parent=0 // pred_fallthru
    _
  // Predicated region
  $region18: #{breakout_qnet_forward.3} parent=0 // pred_check
    _
  $region19: #{breakout_qnet_forward.3} parent=0 // pred_check_branch
    %337 = sbr.rel (0) target = $region21
  $region20: #{breakout_qnet_forward.3} parent=0 // pred_region
    _
  $region21: #{breakout_qnet_forward.3} parent=0 // pred_fallthru
    _

// kernel: breakout_qnet_forward.4
$region0: #{breakout_qnet_forward.4}
  #allocation0 [shape = 'u32[]', space=smem, size = 0x4, offset = 0x4, fixed_abs, tag = 'smem constant byte address 0x4 - core index']
  #allocation1 [shape = 'u32[144,128]{1,0:T(1,128)}', space=vmem, size = 0x12000, scoped, tag = 'internal scratch']
  %s0 = inlined_call_operand.vmem [shape: bf16[8,256], index: 0, kind: input, shape index: {}]
  %s1 = inlined_call_operand.vmem [shape: bf16[256,32], index: 1, kind: input, shape index: {}]
  %s2 = inlined_call_operand.vmem [shape: f32[1,32], index: 2, kind: input, shape index: {}]
  %s3 = inlined_call_operand.vmem [shape: bf16[8,32], index: 3, kind: output, shape index: {}]
  %s4 = sld [smem:[#allocation0]]
  $region22: #{breakout_qnet_forward.4} parent=0
    _
  %s6 = ssub.s32 1, %s4
  %s7 = scalar_select 0, %s6, %s4
  // Predicated region
  $region2: #{breakout_qnet_forward.4} parent=0 // pred_check
    _
  $region3: #{breakout_qnet_forward.4} parent=0 // pred_check_branch
    %9 = sbr.rel (0) target = $region5
  $region4: #{breakout_qnet_forward.4} parent=0 // pred_region
    _
  $region5: #{breakout_qnet_forward.4} parent=0 // pred_fallthru
    _
  // Predicated region
  $region6: #{breakout_qnet_forward.4} parent=0 // pred_check
    _
  $region7: #{breakout_qnet_forward.4} parent=0 // pred_check_branch
    %11 = sbr.rel (0) target = $region9
  $region8: #{breakout_qnet_forward.4} parent=0 // pred_region
    _
  $region9: #{breakout_qnet_forward.4} parent=0 // pred_fallthru
    _
  // Predicated region
  $region10: #{breakout_qnet_forward.4} parent=0 // pred_check
    _
  $region11: #{breakout_qnet_forward.4} parent=0 // pred_check_branch
    %13 = sbr.rel (0) target = $region13
  $region12: #{breakout_qnet_forward.4} parent=0 // pred_region
    _
  $region13: #{breakout_qnet_forward.4} parent=0 // pred_fallthru
    _
  %v15 = vld [vmem:[%s0] sm:$0xff]
  %v16 = vld [vmem:[%s1] sm:$0xf]
  %v17 = vld [vmem:[%s1 + $0x4] sm:$0xf]
  %v18 = vld [vmem:[%s1 + $0x8] sm:$0xf]
  %v19 = vld [vmem:[%s1 + $0xc] sm:$0xf]
  %v20 = vld [vmem:[%s1 + $0x10] sm:$0xf]
  %v21 = vld [vmem:[%s1 + $0x14] sm:$0xf]
  %v22 = vld [vmem:[%s1 + $0x18] sm:$0xf]
  %v23 = vld [vmem:[%s1 + $0x1c] sm:$0xf]
  %v24 = vld [vmem:[%s1 + $0x20] sm:$0xf]
  %v25 = vld [vmem:[%s1 + $0x24] sm:$0xf]
  %v26 = vld [vmem:[%s1 + $0x28] sm:$0xf]
  %v27 = vld [vmem:[%s1 + $0x2c] sm:$0xf]
  %v28 = vld [vmem:[%s1 + $0x30] sm:$0xf]
  %v29 = vld [vmem:[%s1 + $0x34] sm:$0xf]
  %v30 = vld [vmem:[%s1 + $0x38] sm:$0xf]
  %v31 = vld [vmem:[%s1 + $0x3c] sm:$0xf]
  %v32 = vld [vmem:[%s1 + $0x40] sm:$0xf]
  %v33 = vld [vmem:[%s1 + $0x44] sm:$0xf]
  %v34 = vld [vmem:[%s1 + $0x48] sm:$0xf]
  %v35 = vld [vmem:[%s1 + $0x4c] sm:$0xf]
  %v36 = vld [vmem:[%s1 + $0x50] sm:$0xf]
  %v37 = vld [vmem:[%s1 + $0x54] sm:$0xf]
  %v38 = vld [vmem:[%s1 + $0x58] sm:$0xf]
  %v39 = vld [vmem:[%s1 + $0x5c] sm:$0xf]
  %v40 = vld [vmem:[%s1 + $0x60] sm:$0xf]
  %v41 = vld [vmem:[%s1 + $0x64] sm:$0xf]
  %v42 = vld [vmem:[%s1 + $0x68] sm:$0xf]
  %v43 = vld [vmem:[%s1 + $0x6c] sm:$0xf]
  %v44 = vld [vmem:[%s1 + $0x70] sm:$0xf]
  %v45 = vld [vmem:[%s1 + $0x74] sm:$0xf]
  %v46 = vld [vmem:[%s1 + $0x78] sm:$0xf]
  %v47 = vld [vmem:[%s1 + $0x7c] sm:$0xf]
  %v48 = vld [vmem:[%s2] sm:$0x1]
  %v50 = vlaneseq
  %v51 = vshrl.u32 %v50, 7
  %v52 = vsub.s32 0, %v51
  %v53 = vrot.slane %v48, %v52
  %v56 = vunpack.c.l.b16 %v15
  %v57 = vunpack.c.h.b16 %v15
  %v58 = vpack.c.b16 %v56, %v56
  %v59 = vpack.c.b16 %v57, %v57
  %v94 = vunpack.c.l.b16 %v16
  %v95 = vunpack.c.l.b16 %v17
  %v96 = vunpack.c.l.b16 %v18
  %v97 = vunpack.c.l.b16 %v19
  %v98 = vunpack.c.l.b16 %v20
  %v99 = vunpack.c.l.b16 %v21
  %v100 = vunpack.c.l.b16 %v22
  %v101 = vunpack.c.l.b16 %v23
  %v102 = vunpack.c.l.b16 %v24
  %v103 = vunpack.c.l.b16 %v25
  %v104 = vunpack.c.l.b16 %v26
  %v105 = vunpack.c.l.b16 %v27
  %v106 = vunpack.c.l.b16 %v28
  %v107 = vunpack.c.l.b16 %v29
  %v108 = vunpack.c.l.b16 %v30
  %v109 = vunpack.c.l.b16 %v31
  %v110 = vunpack.c.l.b16 %v32
  %v111 = vunpack.c.l.b16 %v33
  %v112 = vunpack.c.l.b16 %v34
  %v113 = vunpack.c.l.b16 %v35
  %v114 = vunpack.c.l.b16 %v36
  %v115 = vunpack.c.l.b16 %v37
  %v116 = vunpack.c.l.b16 %v38
  %v117 = vunpack.c.l.b16 %v39
  %v118 = vunpack.c.l.b16 %v40
  %v119 = vunpack.c.l.b16 %v41
  %v120 = vunpack.c.l.b16 %v42
  %v121 = vunpack.c.l.b16 %v43
  %v122 = vunpack.c.l.b16 %v44
  %v123 = vunpack.c.l.b16 %v45
  %v124 = vunpack.c.l.b16 %v46
  %v125 = vunpack.c.l.b16 %v47
  %v126 = vpack.c.b16 %v95, %v94
  %v127 = vpack.c.b16 %v97, %v96
  %v128 = vpack.c.b16 %v99, %v98
  %v129 = vpack.c.b16 %v101, %v100
  %v130 = vpack.c.b16 %v103, %v102
  %v131 = vpack.c.b16 %v105, %v104
  %v132 = vpack.c.b16 %v107, %v106
  %v133 = vpack.c.b16 %v109, %v108
  %v134 = vpack.c.b16 %v111, %v110
  %v135 = vpack.c.b16 %v113, %v112
  %v136 = vpack.c.b16 %v115, %v114
  %v137 = vpack.c.b16 %v117, %v116
  %v138 = vpack.c.b16 %v119, %v118
  %v139 = vpack.c.b16 %v121, %v120
  %v140 = vpack.c.b16 %v123, %v122
  %v141 = vpack.c.b16 %v125, %v124
  %158 = vmatprep.subr.bf16.mxu0 0
  %159 = vmatpush1.bf16.msra.mxu0 %v126
  %160 = vmatprep.subr.bf16.mxu0 0
  %161 = vmatpush1.bf16.msra.mxu0 %v127
  %162 = vmatprep.subr.bf16.mxu0 0
  %163 = vmatpush1.bf16.msra.mxu0 %v128
  %164 = vmatprep.subr.bf16.mxu0 0
  %165 = vmatpush1.bf16.msra.mxu0 %v129
  %166 = vmatprep.subr.bf16.mxu0 0
  %167 = vmatpush1.bf16.msra.mxu0 %v130
  %168 = vmatprep.subr.bf16.mxu0 0
  %169 = vmatpush1.bf16.msra.mxu0 %v131
  %170 = vmatprep.subr.bf16.mxu0 0
  %171 = vmatpush1.bf16.msra.mxu0 %v132
  %172 = vmatprep.subr.bf16.mxu0 0
  %173 = vmatpush1.bf16.msra.mxu0 %v133
  %174 = vmatprep.subr.bf16.mxu0 0
  %175 = vmatpush1.bf16.msra.mxu0 %v134
  %176 = vmatprep.subr.bf16.mxu0 0
  %177 = vmatpush1.bf16.msra.mxu0 %v135
  %178 = vmatprep.subr.bf16.mxu0 0
  %179 = vmatpush1.bf16.msra.mxu0 %v136
  %180 = vmatprep.subr.bf16.mxu0 0
  %181 = vmatpush1.bf16.msra.mxu0 %v137
  %182 = vmatprep.subr.bf16.mxu0 0
  %183 = vmatpush1.bf16.msra.mxu0 %v138
  %184 = vmatprep.subr.bf16.mxu0 0
  %185 = vmatpush1.bf16.msra.mxu0 %v139
  %186 = vmatprep.subr.bf16.mxu0 0
  %187 = vmatpush1.bf16.msra.mxu0 %v140
  %188 = vmatprep.subr.bf16.mxu0 0
  %189 = vmatpush1.bf16.msra.mxu0 %v141
  %190 = vmatprep.mubr.bf16.mxu0 %v59
  %191 = vmatmul.mubr.bf16.gmra.mrb[0].mxu0 %v58
  %v192 = vpop.f32.mrb[0].mxu0
  %v193 = vadd.f32 %v53, %v192
  %v194 = vpop.f32.mrb[0].mxu0
  %v195 = vpop.f32.mrb[0].mxu0
  %v196 = vpop.f32.mrb[0].mxu0
  %197 = vdwg.mxu0
  %v198 = vmax.f32 %v193, 0.0
  %v199 = vpack.c.bf16 %v198, %v198
  %vm200 = vcmask 257024
  %201 = vst.msk [vmem:[%s3] sm:$0xf] %vm200, %v199
  // Predicated region
  $region14: #{breakout_qnet_forward.4} parent=0 // pred_check
    _
  $region15: #{breakout_qnet_forward.4} parent=0 // pred_check_branch
    %203 = sbr.rel (0) target = $region17
  $region16: #{breakout_qnet_forward.4} parent=0 // pred_region
    _
  $region17: #{breakout_qnet_forward.4} parent=0 // pred_fallthru
    _
  // Predicated region
  $region18: #{breakout_qnet_forward.4} parent=0 // pred_check
    _
  $region19: #{breakout_qnet_forward.4} parent=0 // pred_check_branch
    %205 = sbr.rel (0) target = $region21
  $region20: #{breakout_qnet_forward.4} parent=0 // pred_region
    _
  $region21: #{breakout_qnet_forward.4} parent=0 // pred_fallthru
    _

// kernel: breakout_qnet_forward.5
$region0: #{breakout_qnet_forward.5}
  #allocation0 [shape = 'u32[]', space=smem, size = 0x4, offset = 0x4, fixed_abs, tag = 'smem constant byte address 0x4 - core index']
  #allocation1 [shape = 'u32[144,128]{1,0:T(1,128)}', space=vmem, size = 0x12000, scoped, tag = 'internal scratch']
  %s0 = inlined_call_operand.vmem [shape: bf16[8,128], index: 0, kind: input, shape index: {}]
  %s1 = inlined_call_operand.vmem [shape: bf16[128,256], index: 1, kind: input, shape index: {}]
  %s2 = inlined_call_operand.vmem [shape: f32[1,256], index: 2, kind: input, shape index: {}]
  %s3 = inlined_call_operand.vmem [shape: bf16[256,128], index: 3, kind: input, shape index: {}]
  %s4 = inlined_call_operand.vmem [shape: f32[1,128], index: 4, kind: input, shape index: {}]
  %s5 = inlined_call_operand.vmem [shape: f32[8,128], index: 5, kind: output, shape index: {}]
  %s6 = sld [smem:[#allocation0]]
  $region30: #{breakout_qnet_forward.5} parent=0
    _
  %s8 = ssub.s32 1, %s6
  %s9 = scalar_select 0, %s8, %s6
  // Predicated region
  $region2: #{breakout_qnet_forward.5} parent=0 // pred_check
    _
  $region3: #{breakout_qnet_forward.5} parent=0 // pred_check_branch
    %11 = sbr.rel (0) target = $region5
  $region4: #{breakout_qnet_forward.5} parent=0 // pred_region
    _
  $region5: #{breakout_qnet_forward.5} parent=0 // pred_fallthru
    _
  // Predicated region
  $region6: #{breakout_qnet_forward.5} parent=0 // pred_check
    _
  $region7: #{breakout_qnet_forward.5} parent=0 // pred_check_branch
    %13 = sbr.rel (0) target = $region9
  $region8: #{breakout_qnet_forward.5} parent=0 // pred_region
    _
  $region9: #{breakout_qnet_forward.5} parent=0 // pred_fallthru
    _
  // Predicated region
  $region10: #{breakout_qnet_forward.5} parent=0 // pred_check
    _
  $region11: #{breakout_qnet_forward.5} parent=0 // pred_check_branch
    %15 = sbr.rel (0) target = $region13
  $region12: #{breakout_qnet_forward.5} parent=0 // pred_region
    _
  $region13: #{breakout_qnet_forward.5} parent=0 // pred_fallthru
    _
  // Predicated region
  $region14: #{breakout_qnet_forward.5} parent=0 // pred_check
    _
  $region15: #{breakout_qnet_forward.5} parent=0 // pred_check_branch
    %17 = sbr.rel (0) target = $region17
  $region16: #{breakout_qnet_forward.5} parent=0 // pred_region
    _
  $region17: #{breakout_qnet_forward.5} parent=0 // pred_fallthru
    _
  // Predicated region
  $region18: #{breakout_qnet_forward.5} parent=0 // pred_check
    _
  $region19: #{breakout_qnet_forward.5} parent=0 // pred_check_branch
    %19 = sbr.rel (0) target = $region21
  $region20: #{breakout_qnet_forward.5} parent=0 // pred_region
    _
  $region21: #{breakout_qnet_forward.5} parent=0 // pred_fallthru
    _
  %v21 = vld [vmem:[%s0] sm:$0xf]
  %v22 = vld [vmem:[%s1] sm:$0xff]
  %v23 = vld [vmem:[%s1 + $0x8] sm:$0xff]
  %v24 = vld [vmem:[%s1 + $0x10] sm:$0xff]
  %v25 = vld [vmem:[%s1 + $0x18] sm:$0xff]
  %v26 = vld [vmem:[%s1 + $0x20] sm:$0xff]
  %v27 = vld [vmem:[%s1 + $0x28] sm:$0xff]
  %v28 = vld [vmem:[%s1 + $0x30] sm:$0xff]
  %v29 = vld [vmem:[%s1 + $0x38] sm:$0xff]
  %v30 = vld [vmem:[%s1 + $0x40] sm:$0xff]
  %v31 = vld [vmem:[%s1 + $0x48] sm:$0xff]
  %v32 = vld [vmem:[%s1 + $0x50] sm:$0xff]
  %v33 = vld [vmem:[%s1 + $0x58] sm:$0xff]
  %v34 = vld [vmem:[%s1 + $0x60] sm:$0xff]
  %v35 = vld [vmem:[%s1 + $0x68] sm:$0xff]
  %v36 = vld [vmem:[%s1 + $0x70] sm:$0xff]
  %v37 = vld [vmem:[%s1 + $0x78] sm:$0xff]
  %v38 = vld [vmem:[%s2] sm:$0x3]
  %v40 = vlaneseq
  %v41 = vshrl.u32 %v40, 7
  %v42 = vsub.s32 0, %v41
  %v43 = vrot.slane %v38, %v42
  %v44 = vlaneseq
  %v45 = vshrl.u32 %v44, 7
  %v46 = vsub.s32 1, %v45
  %v47 = vrot.slane %v38, %v46
  %v66 = vunpack.c.l.b16 %v22
  %v67 = vunpack.c.h.b16 %v22
  %v68 = vunpack.c.l.b16 %v23
  %v69 = vunpack.c.h.b16 %v23
  %v70 = vunpack.c.l.b16 %v24
  %v71 = vunpack.c.h.b16 %v24
  %v72 = vunpack.c.l.b16 %v25
  %v73 = vunpack.c.h.b16 %v25
  %v74 = vunpack.c.l.b16 %v26
  %v75 = vunpack.c.h.b16 %v26
  %v76 = vunpack.c.l.b16 %v27
  %v77 = vunpack.c.h.b16 %v27
  %v78 = vunpack.c.l.b16 %v28
  %v79 = vunpack.c.h.b16 %v28
  %v80 = vunpack.c.l.b16 %v29
  %v81 = vunpack.c.h.b16 %v29
  %v82 = vunpack.c.l.b16 %v30
  %v83 = vunpack.c.h.b16 %v30
  %v84 = vunpack.c.l.b16 %v31
  %v85 = vunpack.c.h.b16 %v31
  %v86 = vunpack.c.l.b16 %v32
  %v87 = vunpack.c.h.b16 %v32
  %v88 = vunpack.c.l.b16 %v33
  %v89 = vunpack.c.h.b16 %v33
  %v90 = vunpack.c.l.b16 %v34
  %v91 = vunpack.c.h.b16 %v34
  %v92 = vunpack.c.l.b16 %v35
  %v93 = vunpack.c.h.b16 %v35
  %v94 = vunpack.c.l.b16 %v36
  %v95 = vunpack.c.h.b16 %v36
  %v96 = vunpack.c.l.b16 %v37
  %v97 = vunpack.c.h.b16 %v37
  %v98 = vpack.c.b16 %v68, %v66
  %v99 = vpack.c.b16 %v69, %v67
  %v100 = vpack.c.b16 %v72, %v70
  %v101 = vpack.c.b16 %v73, %v71
  %v102 = vpack.c.b16 %v76, %v74
  %v103 = vpack.c.b16 %v77, %v75
  %v104 = vpack.c.b16 %v80, %v78
  %v105 = vpack.c.b16 %v81, %v79
  %v106 = vpack.c.b16 %v84, %v82
  %v107 = vpack.c.b16 %v85, %v83
  %v108 = vpack.c.b16 %v88, %v86
  %v109 = vpack.c.b16 %v89, %v87
  %v110 = vpack.c.b16 %v92, %v90
  %v111 = vpack.c.b16 %v93, %v91
  %v112 = vpack.c.b16 %v96, %v94
  %v113 = vpack.c.b16 %v97, %v95
  %130 = vmatprep.subr.bf16.mxu0 %v99
  %131 = vmatpush1.bf16.msra.mxu0 %v98
  %132 = vmatprep.subr.bf16.mxu0 %v101
  %133 = vmatpush1.bf16.msra.mxu0 %v100
  %134 = vmatprep.subr.bf16.mxu0 %v103
  %135 = vmatpush1.bf16.msra.mxu0 %v102
  %136 = vmatprep.subr.bf16.mxu0 %v105
  %137 = vmatpush1.bf16.msra.mxu0 %v104
  %138 = vmatprep.subr.bf16.mxu0 %v107
  %139 = vmatpush1.bf16.msra.mxu0 %v106
  %140 = vmatprep.subr.bf16.mxu0 %v109
  %141 = vmatpush1.bf16.msra.mxu0 %v108
  %142 = vmatprep.subr.bf16.mxu0 %v111
  %143 = vmatpush1.bf16.msra.mxu0 %v110
  %144 = vmatprep.subr.bf16.mxu0 %v113
  %145 = vmatpush1.bf16.msra.mxu0 %v112
  %146 = vmatprep.subr.bf16.mxu0 0
  %147 = vmatpush1.bf16.msra.mxu0 0
  %148 = vmatprep.subr.bf16.mxu0 0
  %149 = vmatpush1.bf16.msra.mxu0 0
  %150 = vmatprep.subr.bf16.mxu0 0
  %151 = vmatpush1.bf16.msra.mxu0 0
  %152 = vmatprep.subr.bf16.mxu0 0
  %153 = vmatpush1.bf16.msra.mxu0 0
  %154 = vmatprep.subr.bf16.mxu0 0
  %155 = vmatpush1.bf16.msra.mxu0 0
  %156 = vmatprep.subr.bf16.mxu0 0
  %157 = vmatpush1.bf16.msra.mxu0 0
  %158 = vmatprep.subr.bf16.mxu0 0
  %159 = vmatpush1.bf16.msra.mxu0 0
  %160 = vmatprep.subr.bf16.mxu0 0
  %161 = vmatpush1.bf16.msra.mxu0 0
  %162 = vmatprep.mubr.bf16.mxu0 0
  %163 = vmatmul.mubr.bf16.gmra.mrb[0].mxu0 %v21
  %v164 = vpop.f32.mrb[0].mxu0
  %v165 = vadd.f32 %v43, %v164
  %v166 = vpop.f32.mrb[0].mxu0
  %v167 = vadd.f32 %v47, %v166
  %v168 = vpop.f32.mrb[0].mxu0
  %v169 = vpop.f32.mrb[0].mxu0
  %170 = vdwg.mxu0
  %v171 = vmax.f32 %v165, 0.0
  %v172 = vmax.f32 %v167, 0.0
  %v173 = vpack.c.bf16 %v171, %v171
  %v174 = vpack.c.bf16 %v172, %v172
  %v175 = vld [vmem:[%s3] sm:$0xf]
  %v176 = vld [vmem:[%s3 + $0x4] sm:$0xf]
  %v177 = vld [vmem:[%s3 + $0x8] sm:$0xf]
  %v178 = vld [vmem:[%s3 + $0xc] sm:$0xf]
  %v179 = vld [vmem:[%s3 + $0x10] sm:$0xf]
  %v180 = vld [vmem:[%s3 + $0x14] sm:$0xf]
  %v181 = vld [vmem:[%s3 + $0x18] sm:$0xf]
  %v182 = vld [vmem:[%s3 + $0x1c] sm:$0xf]
  %v183 = vld [vmem:[%s3 + $0x20] sm:$0xf]
  %v184 = vld [vmem:[%s3 + $0x24] sm:$0xf]
  %v185 = vld [vmem:[%s3 + $0x28] sm:$0xf]
  %v186 = vld [vmem:[%s3 + $0x2c] sm:$0xf]
  %v187 = vld [vmem:[%s3 + $0x30] sm:$0xf]
  %v188 = vld [vmem:[%s3 + $0x34] sm:$0xf]
  %v189 = vld [vmem:[%s3 + $0x38] sm:$0xf]
  %v190 = vld [vmem:[%s3 + $0x3c] sm:$0xf]
  %v191 = vld [vmem:[%s3 + $0x40] sm:$0xf]
  %v192 = vld [vmem:[%s3 + $0x44] sm:$0xf]
  %v193 = vld [vmem:[%s3 + $0x48] sm:$0xf]
  %v194 = vld [vmem:[%s3 + $0x4c] sm:$0xf]
  %v195 = vld [vmem:[%s3 + $0x50] sm:$0xf]
  %v196 = vld [vmem:[%s3 + $0x54] sm:$0xf]
  %v197 = vld [vmem:[%s3 + $0x58] sm:$0xf]
  %v198 = vld [vmem:[%s3 + $0x5c] sm:$0xf]
  %v199 = vld [vmem:[%s3 + $0x60] sm:$0xf]
  %v200 = vld [vmem:[%s3 + $0x64] sm:$0xf]
  %v201 = vld [vmem:[%s3 + $0x68] sm:$0xf]
  %v202 = vld [vmem:[%s3 + $0x6c] sm:$0xf]
  %v203 = vld [vmem:[%s3 + $0x70] sm:$0xf]
  %v204 = vld [vmem:[%s3 + $0x74] sm:$0xf]
  %v205 = vld [vmem:[%s3 + $0x78] sm:$0xf]
  %v206 = vld [vmem:[%s3 + $0x7c] sm:$0xf]
  %v207 = vld [vmem:[%s4] sm:$0x1]
  %v209 = vlaneseq
  %v210 = vshrl.u32 %v209, 7
  %v211 = vsub.s32 0, %v210
  %v212 = vrot.slane %v207, %v211
  %v246 = vunpack.c.l.b16 %v175
  %v247 = vunpack.c.l.b16 %v176
  %v248 = vunpack.c.l.b16 %v177
  %v249 = vunpack.c.l.b16 %v178
  %v250 = vunpack.c.l.b16 %v179
  %v251 = vunpack.c.l.b16 %v180
  %v252 = vunpack.c.l.b16 %v181
  %v253 = vunpack.c.l.b16 %v182
  %v254 = vunpack.c.l.b16 %v183
  %v255 = vunpack.c.l.b16 %v184
  %v256 = vunpack.c.l.b16 %v185
  %v257 = vunpack.c.l.b16 %v186
  %v258 = vunpack.c.l.b16 %v187
  %v259 = vunpack.c.l.b16 %v188
  %v260 = vunpack.c.l.b16 %v189
  %v261 = vunpack.c.l.b16 %v190
  %v262 = vunpack.c.l.b16 %v191
  %v263 = vunpack.c.l.b16 %v192
  %v264 = vunpack.c.l.b16 %v193
  %v265 = vunpack.c.l.b16 %v194
  %v266 = vunpack.c.l.b16 %v195
  %v267 = vunpack.c.l.b16 %v196
  %v268 = vunpack.c.l.b16 %v197
  %v269 = vunpack.c.l.b16 %v198
  %v270 = vunpack.c.l.b16 %v199
  %v271 = vunpack.c.l.b16 %v200
  %v272 = vunpack.c.l.b16 %v201
  %v273 = vunpack.c.l.b16 %v202
  %v274 = vunpack.c.l.b16 %v203
  %v275 = vunpack.c.l.b16 %v204
  %v276 = vunpack.c.l.b16 %v205
  %v277 = vunpack.c.l.b16 %v206
  %v278 = vpack.c.b16 %v247, %v246
  %v279 = vpack.c.b16 %v249, %v248
  %v280 = vpack.c.b16 %v251, %v250
  %v281 = vpack.c.b16 %v253, %v252
  %v282 = vpack.c.b16 %v255, %v254
  %v283 = vpack.c.b16 %v257, %v256
  %v284 = vpack.c.b16 %v259, %v258
  %v285 = vpack.c.b16 %v261, %v260
  %v286 = vpack.c.b16 %v263, %v262
  %v287 = vpack.c.b16 %v265, %v264
  %v288 = vpack.c.b16 %v267, %v266
  %v289 = vpack.c.b16 %v269, %v268
  %v290 = vpack.c.b16 %v271, %v270
  %v291 = vpack.c.b16 %v273, %v272
  %v292 = vpack.c.b16 %v275, %v274
  %v293 = vpack.c.b16 %v277, %v276
  %310 = vmatprep.subr.bf16.mxu0 0
  %311 = vmatpush1.bf16.msra.mxu0 %v278
  %312 = vmatprep.subr.bf16.mxu0 0
  %313 = vmatpush1.bf16.msra.mxu0 %v279
  %314 = vmatprep.subr.bf16.mxu0 0
  %315 = vmatpush1.bf16.msra.mxu0 %v280
  %316 = vmatprep.subr.bf16.mxu0 0
  %317 = vmatpush1.bf16.msra.mxu0 %v281
  %318 = vmatprep.subr.bf16.mxu0 0
  %319 = vmatpush1.bf16.msra.mxu0 %v282
  %320 = vmatprep.subr.bf16.mxu0 0
  %321 = vmatpush1.bf16.msra.mxu0 %v283
  %322 = vmatprep.subr.bf16.mxu0 0
  %323 = vmatpush1.bf16.msra.mxu0 %v284
  %324 = vmatprep.subr.bf16.mxu0 0
  %325 = vmatpush1.bf16.msra.mxu0 %v285
  %326 = vmatprep.subr.bf16.mxu0 0
  %327 = vmatpush1.bf16.msra.mxu0 %v286
  %328 = vmatprep.subr.bf16.mxu0 0
  %329 = vmatpush1.bf16.msra.mxu0 %v287
  %330 = vmatprep.subr.bf16.mxu0 0
  %331 = vmatpush1.bf16.msra.mxu0 %v288
  %332 = vmatprep.subr.bf16.mxu0 0
  %333 = vmatpush1.bf16.msra.mxu0 %v289
  %334 = vmatprep.subr.bf16.mxu0 0
  %335 = vmatpush1.bf16.msra.mxu0 %v290
  %336 = vmatprep.subr.bf16.mxu0 0
  %337 = vmatpush1.bf16.msra.mxu0 %v291
  %338 = vmatprep.subr.bf16.mxu0 0
  %339 = vmatpush1.bf16.msra.mxu0 %v292
  %340 = vmatprep.subr.bf16.mxu0 0
  %341 = vmatpush1.bf16.msra.mxu0 %v293
  %342 = vmatprep.mubr.bf16.mxu0 %v174
  %343 = vmatmul.mubr.bf16.gmra.mrb[0].mxu0 %v173
  %v344 = vpop.f32.mrb[0].mxu0
  %v345 = vadd.f32 %v212, %v344
  %v346 = vpop.f32.mrb[0].mxu0
  %v347 = vpop.f32.mrb[0].mxu0
  %v348 = vpop.f32.mrb[0].mxu0
  %349 = vdwg.mxu0
  %350 = vst [vmem:[%s5] sm:$0xff] %v345
  // Predicated region
  $region22: #{breakout_qnet_forward.5} parent=0 // pred_check
    _
  $region23: #{breakout_qnet_forward.5} parent=0 // pred_check_branch
    %352 = sbr.rel (0) target = $region25
  $region24: #{breakout_qnet_forward.5} parent=0 // pred_region
    _
  $region25: #{breakout_qnet_forward.5} parent=0 // pred_fallthru
    _
  // Predicated region
  $region26: #{breakout_qnet_forward.5} parent=0 // pred_check
    _
  $region27: #{breakout_qnet_forward.5} parent=0 // pred_check_branch
    %354 = sbr.rel (0) target = $region29
  $region28: #{breakout_qnet_forward.5} parent=0 // pred_region
    _
  $region29: #{breakout_qnet_forward.5} parent=0 // pred_fallthru
    _

</llo_original>
